<compile_context>
chip_gen: v7x
topology: tpu7x:2x2x1
jax: 0.10.0
libtpu: 0.0.40
codegen_flags: <defaults>
</compile_context>

<pallas_src>
import math

import numpy as np
import jax
import jax.numpy as jnp
from jax.experimental import pallas as pl
from jax.experimental.pallas import tpu as pltpu


def _pos_kernel(emb_ref, w_ref, pos_ref):
    # (TR, K) @ (K, LW) on the MXU with fp32 contraction, then one sin pass.
    arg = jnp.dot(emb_ref[...], w_ref[...],
                  preferred_element_type=jnp.float32,
                  precision=jax.lax.Precision.HIGHEST)
    pos_ref[...] = jnp.sin(arg).astype(pos_ref.dtype)


def decoder_position_embedding(x, mask=None, *, num_pos_feats=64,
                               temperature=10000, normalize=False, scale=None):
    """Matches DecoderPositionEmbedding.forward. Returns (pos, mask_flat)."""
    if scale is not None and not normalize:
        raise ValueError("normalize should be True if scale is passed")
    scale_val = 2 * math.pi if scale is None else scale

    if x.ndim == 3:
        b, l, c = x.shape
        grid_size = int(math.sqrt(l))
        if grid_size * grid_size != l:
            raise ValueError(f"token count {l} does not form a square grid")
        h = w = grid_size
    elif x.ndim == 4:
        b, c, h, w = x.shape
    else:
        raise ValueError("input hidden states with wrong shape.")

    if mask is None:
        mask = jnp.ones((b, h, w), dtype=jnp.bool_)
    # TODO(synk): bilinear interpolation (F.interpolate) of a mismatched-resolution
    # mask is not implemented; the mask must already be (b, h, w).
    if mask.shape[-2:] != (h, w):
        raise NotImplementedError("mask resizing not supported in this kernel")

    NPF = num_pos_feats
    C = 2 * NPF
    L = h * w
    R = b * L

    # --- XLA-side prep: cumsums + normalization (cheap, O(b*h*w)). -------------
    mask_f = mask.astype(jnp.float32)
    y_embed = jnp.cumsum(mask_f, axis=1)          # (b, h, w)
    x_embed = jnp.cumsum(mask_f, axis=2)          # (b, h, w)
    if normalize:
        eps = 1e-6
        y_embed = y_embed / (y_embed[:, -1:, :] + eps) * scale_val
        x_embed = x_embed / (x_embed[:, :, -1:] + eps) * scale_val

    # --- Lane packing: G spatial rows per stored row so the stored block is
    #     lane-dense (width lcm(C, 128)); G == 1 when C is already 128-aligned.
    G = 128 // math.gcd(C, 128)
    if G * C > 512:                  # keep W / block width sane for awkward C
        G = 1                        # (falls back to masked stores)
    LW = G * C                       # kernel output lane width
    K = 2 * G + 1                    # y,x per packed row + 1.0 column for the phase
    K_pad = ((K + 7) // 8) * 8       # zero-pad K for clean MXU operand shapes

    RG = -(-R // G)                  # packed rows
    RG = ((RG + 7) // 8) * 8         # sublane-align all row block sizes
    R_pad = RG * G

    emb = jnp.stack([y_embed.reshape(R), x_embed.reshape(R)], axis=-1)  # (R, 2)
    if R_pad != R:
        emb = jnp.pad(emb, ((0, R_pad - R), (0, 0)))
    emb = emb.reshape(RG, 2 * G)                                         # (RG, 2G)
    emb = jnp.concatenate(
        [emb,
         jnp.ones((RG, 1), jnp.float32),            # picks up the phase row of W
         jnp.zeros((RG, K_pad - K), jnp.float32)],  # zero K padding
        axis=-1)                                                         # (RG, K_pad)

    # --- Constant weight matrix (host-side): block-diag 1/dim_t + phase row. ----
    kk = np.arange(NPF, dtype=np.float32)
    dim_t = np.float64(temperature) ** (2.0 * np.floor(kk / 2.0) / float(NPF))
    inv_dim_t = (1.0 / dim_t).astype(np.float32)
    phase = ((np.arange(NPF) % 2) * (0.5 * np.pi)).astype(np.float32)  # 0 / pi/2
    w_np = np.zeros((K_pad, LW), np.float32)
    for g in range(G):
        w_np[2 * g,     g * C:       g * C + NPF] = inv_dim_t   # y half of group g
        w_np[2 * g + 1, g * C + NPF: (g + 1) * C] = inv_dim_t   # x half of group g
    w_np[2 * G, :] = np.tile(np.concatenate([phase, phase]), G)  # phase (cos = sin+pi/2)
    W = jnp.asarray(w_np)

    # --- Tiling: 1-D grid over packed rows, ~1 MiB lane-dense output blocks. ----
    tr = max(512, (2048 * 128) // LW)
    tr = (tr // 8) * 8
    TR = RG if RG <= tr else tr
    grid = (pl.cdiv(RG, TR),)

    out_dtype = x.dtype
    cost = pl.CostEstimate(
        flops=2 * RG * K_pad * LW,
        transcendentals=RG * LW,
        bytes_accessed=RG * K_pad * 4 + K_pad * LW * 4
                       + RG * LW * jnp.dtype(out_dtype).itemsize)

    pos = pl.pallas_call(
        _pos_kernel,
        out_shape=jax.ShapeDtypeStruct((RG, LW), out_dtype),
        grid=grid,
        in_specs=[
            pl.BlockSpec((TR, K_pad), lambda r: (r, 0)),     # packed embeds (streamed)
            pl.BlockSpec((K_pad, LW), lambda r: (0, 0)),     # constant W (resident)
        ],
        out_specs=pl.BlockSpec((TR, LW), lambda r: (r, 0)),
        compiler_params=pltpu.CompilerParams(
            dimension_semantics=("parallel",)),              # megacore-shardable
        cost_estimate=cost,
    )(emb, W)

    # Unpack lane groups, drop padding, and apply the module's .view(b, -1, c).
    pos = pos.reshape(R_pad, C)[:R].reshape(b, -1, c)
    mask_flat = mask.reshape(b, L)
    return pos, mask_flat


def _reference(x, mask=None, *, num_pos_feats=64, temperature=10000,
               normalize=False, scale=None):
    """Pure-JAX reference mirroring the PyTorch forward."""
    scale_val = 2 * math.pi if scale is None else scale
    if x.ndim == 3:
        b, l, c = x.shape
        g = int(math.sqrt(l))
        h = w = g
    else:
        b, c, h, w = x.shape
    if mask is None:
        mask = jnp.ones((b, h, w), jnp.bool_)
    m = mask.astype(jnp.float32)
    y_embed = jnp.cumsum(m, axis=1)
    x_embed = jnp.cumsum(m, axis=2)
    if normalize:
        eps = 1e-6
        y_embed = y_embed / (y_embed[:, -1:, :] + eps) * scale_val
        x_embed = x_embed / (x_embed[:, :, -1:] + eps) * scale_val
    k = jnp.arange(num_pos_feats, dtype=jnp.float32)
    dim_t = jnp.asarray(temperature, jnp.float32) ** (2.0 * jnp.floor(k / 2.0) / num_pos_feats)
    px = x_embed[..., None] / dim_t
    py = y_embed[..., None] / dim_t
    px = jnp.stack([jnp.sin(px[..., 0::2]), jnp.cos(px[..., 1::2])], axis=4).reshape(b, h, w, -1)
    py = jnp.stack([jnp.sin(py[..., 0::2]), jnp.cos(py[..., 1::2])], axis=4).reshape(b, h, w, -1)
    pos = jnp.concatenate([py, px], axis=-1)       # (b, h, w, 2*NPF)
    return pos.reshape(b, -1, c).astype(x.dtype), mask.reshape(b, h * w)


if __name__ == "__main__":
    key = jax.random.PRNGKey(0)
    k1, k2, k3, k4 = jax.random.split(key, 4)

    # Case 1: token input (B, L, C), 4x4 grid, C=32 -> lane-packed output path (G=4).
    b, l, c = 2, 16, 32
    npf = c // 2
    x1 = jax.random.normal(k1, (b, l, c), dtype=jnp.float32)
    pos1, m1 = jax.block_until_ready(decoder_position_embedding(x1, num_pos_feats=npf))
    ref1, rm1 = _reference(x1, num_pos_feats=npf)
    assert pos1.shape == (b, l, c) and pos1.dtype == x1.dtype
    assert m1.shape == (b, l) and m1.dtype == jnp.bool_
    assert jnp.allclose(pos1, ref1, atol=1e-4, rtol=1e-5), \
        float(jnp.max(jnp.abs(pos1 - ref1)))
    assert bool(jnp.all(m1 == rm1))

    # Case 2: NCHW (B, C, H, W), explicit mask, normalize=True, C=128 (G=1 path).
    b2, c2, h2, w2 = 2, 128, 8, 8
    npf2 = c2 // 2
    x2 = jax.random.normal(k2, (b2, c2, h2, w2), dtype=jnp.float32)
    mask2 = jax.random.uniform(k3, (b2, h2, w2)) > 0.3
    pos2, m2 = jax.block_until_ready(
        decoder_position_embedding(x2, mask2, num_pos_feats=npf2, normalize=True))
    ref2, rm2 = _reference(x2, mask2, num_pos_feats=npf2, normalize=True)
    assert pos2.shape == (b2, h2 * w2, c2)
    assert jnp.allclose(pos2, ref2, atol=1e-4, rtol=1e-5), \
        float(jnp.max(jnp.abs(pos2 - ref2)))
    assert bool(jnp.all(m2 == rm2))

    # Case 3: larger NCHW, exercises multi-block 1-D grid with a ragged tail.
    b3, c3, h3, w3 = 2, 128, 48, 48
    npf3 = c3 // 2
    x3 = jax.random.normal(k4, (b3, c3, h3, w3), dtype=jnp.float32)
    pos3, m3 = jax.block_until_ready(decoder_position_embedding(x3, num_pos_feats=npf3))
    ref3, rm3 = _reference(x3, num_pos_feats=npf3)
    assert pos3.shape == (b3, h3 * w3, c3)
    assert jnp.allclose(pos3, ref3, atol=1e-4, rtol=1e-5), \
        float(jnp.max(jnp.abs(pos3 - ref3)))
    assert bool(jnp.all(m3 == rm3))

    print("KERNEL_OK")
</pallas_src>

<mosaic_0001>
module attributes {stable_mosaic.version = 11 : i64} {
  func.func @_pos_kernel(%arg0: i32, %arg1: memref<8x16xf32, #tpu.memory_space<vmem>>, %arg2: memref<16x128xf32, #tpu.memory_space<vmem>>, %arg3: memref<8x128xf32, #tpu.memory_space<vmem>>) attributes {dimension_semantics = [#tpu.dimension_semantics<parallel>], iteration_bounds = array<i64: 1>, scalar_prefetch = 0 : i64, scratch_operands = 0 : i64, tpu.core_type = #tpu.core_type<tc>, window_params = [{transform_indices = @transform_0, window_bounds = array<i64: 8, 16>}, {pipeline_mode = #tpu.pipeline_mode<synchronous>, transform_indices = @transform_1, window_bounds = array<i64: 16, 128>}, {transform_indices = @transform_2, window_bounds = array<i64: 8, 128>}]} {
    %c0 = arith.constant 0 : index
    %c0_0 = arith.constant 0 : index
    %0 = vector.load %arg1[%c0, %c0_0] : memref<8x16xf32, #tpu.memory_space<vmem>>, vector<8x16xf32>
    %c0_1 = arith.constant 0 : index
    %c0_2 = arith.constant 0 : index
    %1 = vector.load %arg2[%c0_1, %c0_2] : memref<16x128xf32, #tpu.memory_space<vmem>>, vector<16x128xf32>
    %cst = arith.constant dense<0.000000e+00> : vector<8x128xf32>
    %2 = tpu.matmul %0, %1, %cst {dimension_numbers = #tpu.dot_dimension_numbers<[1], [0], [0], [1], [0, 0, 1, 1], [], []>, precision = #tpu.contract_precision<fp32>} : vector<8x16xf32>, vector<16x128xf32>, vector<8x128xf32> -> vector<8x128xf32>
    %3 = math.sin %2 : vector<8x128xf32>
    %c0_3 = arith.constant 0 : index
    %c0_4 = arith.constant 0 : index
    %4 = vector.load %arg3[%c0_3, %c0_4] : memref<8x128xf32, #tpu.memory_space<vmem>>, vector<8x128xf32>
    tpu.vector_store %arg3[%c0_3, %c0_4], %3 {strides = array<i32>} : memref<8x128xf32, #tpu.memory_space<vmem>>, vector<8x128xf32>,
    return
  }
  func.func @transform_0(%arg0: i32) -> (i32, i32) {
    %c0_i32 = arith.constant 0 : i32
    %c0_i32_0 = arith.constant 0 : i32
    return %arg0, %c0_i32 : i32, i32
  }
  func.func @transform_1(%arg0: i32) -> (i32, i32) {
    %c0_i32 = arith.constant 0 : i32
    %c0_i32_0 = arith.constant 0 : i32
    %c0_i32_1 = arith.constant 0 : i32
    return %c0_i32, %c0_i32_0 : i32, i32
  }
  func.func @transform_2(%arg0: i32) -> (i32, i32) {
    %c0_i32 = arith.constant 0 : i32
    %c0_i32_0 = arith.constant 0 : i32
    return %arg0, %c0_i32 : i32, i32
  }
}

</mosaic_0001>

<llo_original>
// kernel: tpu_custom_call.1
$region0: #{tpu_custom_call.1}
  #allocation0 [shape = 'u32[]', space=smem, size = 0x4, offset = 0x4, fixed_abs, tag = 'smem constant byte address 0x4 - core index']
  #allocation1 [shape = 'u32[144,128]{1,0:T(1,128)}', space=vmem, size = 0x12000, scoped, tag = 'internal scratch']
  %s0 = inlined_call_operand.hbm [shape: f32[8,16], index: 0, kind: input, shape index: {}]
  %s1 = inlined_call_operand.hbm [shape: f32[16,128], index: 1, kind: input, shape index: {}]
  %s2 = inlined_call_operand.hbm [shape: f32[8,128], index: 2, kind: output, shape index: {}]
  %s3 = sld [smem:[#allocation0]]
  $region26: #{tpu_custom_call.1} parent=0
    _
  %s5 = ssub.s32 1, %s3
  %s6 = scalar_select 0, %s5, %s3
  $region1: #{tpu_custom_call.1} parent=0
    #allocation2 [shape = 'u8[4096]{0}', space=vmem, size = 0x1000, scoped, tag = 'input window, operand 0, single buffered']
    #allocation3 [shape = 's32[1]{0}', space=sflag, size = 0x4, scoped, tag = 'scoped memory for tpu_custom_call.1']
    #allocation4 [shape = 's32[1]{0}', space=sflag, size = 0x4, scoped, tag = 'scoped memory for tpu_custom_call.1']
    #allocation5 [shape = 'u8[8192]{0}', space=vmem, size = 0x2000, scoped, tag = 'input window, operand 1, single buffered']
    #allocation6 [shape = 's32[1]{0}', space=sflag, size = 0x4, scoped, tag = 'scoped memory for tpu_custom_call.1']
    #allocation7 [shape = 'u8[4096]{0}', space=vmem, size = 0x1000, scoped, tag = 'output window, operand 0, single buffered']
    %7 = vsyncpa [#allocation3], 0
    %8 = vsyncpa [#allocation6], 0
    %9 = vsyncpa [#allocation4], 0
    // Predicated region
    $region2: #{tpu_custom_call.1} parent=1 // pred_check
      _
    $region3: #{tpu_custom_call.1} parent=1 // pred_check_branch
      %11 = sbr.rel (0) target = $region5
    $region4: #{tpu_custom_call.1} parent=1 // pred_region
      %s13 = ssub.s32 128, 128
      %14 = vsyncadd [#allocation3], %s13
      %s16 = sshll.u32 [#allocation2], 4
      %s17 = int_to_ptr.vmem [resolvable:$true] %s16
      %19 = dma.hbm_to_vmem [thread:$0]  %s0, 128, %s17, [#allocation3]
    $region5: #{tpu_custom_call.1} parent=1 // pred_fallthru
      _
    // Predicated region
    $region6: #{tpu_custom_call.1} parent=1 // pred_check
      _
    $region7: #{tpu_custom_call.1} parent=1 // pred_check_branch
      %21 = sbr.rel (0) target = $region9
    $region8: #{tpu_custom_call.1} parent=1 // pred_region
      %s23 = ssub.s32 256, 256
      %24 = vsyncadd [#allocation6], %s23
      %s25 = sshll.u32 [#allocation5], 4
      %s26 = int_to_ptr.vmem [resolvable:$true] %s25
      %31 = dma.hbm_to_vmem [thread:$0]  %s1, 256, %s26, [#allocation6], 128, 128, 8
    $region9: #{tpu_custom_call.1} parent=1 // pred_fallthru
      _
    // Predicated region
    $region10: #{tpu_custom_call.1} parent=1 // pred_check
      _
    $region11: #{tpu_custom_call.1} parent=1 // pred_check_branch
      %33 = sbr.rel (0) target = $region13
    $region12: #{tpu_custom_call.1} parent=1 // pred_region
      %34 = dma.done [#allocation3], 128
    $region13: #{tpu_custom_call.1} parent=1 // pred_fallthru
      _
    // Predicated region
    $region14: #{tpu_custom_call.1} parent=1 // pred_check
      _
    $region15: #{tpu_custom_call.1} parent=1 // pred_check_branch
      %36 = sbr.rel (0) target = $region17
    $region16: #{tpu_custom_call.1} parent=1 // pred_region
      %37 = dma.done [#allocation6], 256
    $region17: #{tpu_custom_call.1} parent=1 // pred_fallthru
      _
    %v38 = vld [vmem:[#allocation2] sm:$0xff]
    %v39 = vld [vmem:[#allocation5] sm:$0xff]
    %v40 = vld [vmem:[#allocation5 + $0x8] sm:$0xff]
    %vm41 = vcmask 130048
    %v43 = vsel %vm41, %v38, 0
    %45 = vmatprep.subr.mxu0 0.0
    %v46 = vand.u32 %v39, 4294901760
    %47 = vmatpush1.msra.mxu0 %v46
    %48 = vmatprep.subr.mxu0 0.0
    %v49 = vand.u32 %v40, 4294901760
    %50 = vmatpush1.msra.mxu0 %v49
    %51 = vmatprep.subr.mxu0 0.0
    %52 = vmatpush1.msra.mxu0 0.0
    %53 = vmatprep.subr.mxu0 0.0
    %54 = vmatpush1.msra.mxu0 0.0
    %55 = vmatprep.subr.mxu0 0.0
    %56 = vmatpush1.msra.mxu0 0.0
    %57 = vmatprep.subr.mxu0 0.0
    %58 = vmatpush1.msra.mxu0 0.0
    %59 = vmatprep.subr.mxu0 0.0
    %60 = vmatpush1.msra.mxu0 0.0
    %61 = vmatprep.subr.mxu0 0.0
    %62 = vmatpush1.msra.mxu0 0.0
    %63 = vmatprep.subr.mxu0 0.0
    %64 = vmatpush1.msra.mxu0 0.0
    %65 = vmatprep.subr.mxu0 0.0
    %66 = vmatpush1.msra.mxu0 0.0
    %67 = vmatprep.subr.mxu0 0.0
    %68 = vmatpush1.msra.mxu0 0.0
    %69 = vmatprep.subr.mxu0 0.0
    %70 = vmatpush1.msra.mxu0 0.0
    %71 = vmatprep.subr.mxu0 0.0
    %72 = vmatpush1.msra.mxu0 0.0
    %73 = vmatprep.subr.mxu0 0.0
    %74 = vmatpush1.msra.mxu0 0.0
    %75 = vmatprep.subr.mxu0 0.0
    %76 = vmatpush1.msra.mxu0 0.0
    %77 = vmatprep.subr.mxu0 0.0
    %78 = vmatpush1.msra.mxu0 0.0
    %79 = vmatprep.subr.mxu0 0.0
    %80 = vmatpush1.msra.mxu0 0.0
    %81 = vmatprep.subr.mxu0 0.0
    %82 = vmatpush1.msra.mxu0 0.0
    %83 = vmatprep.subr.mxu0 0.0
    %84 = vmatpush1.msra.mxu0 0.0
    %85 = vmatprep.subr.mxu0 0.0
    %86 = vmatpush1.msra.mxu0 0.0
    %87 = vmatprep.subr.mxu0 0.0
    %88 = vmatpush1.msra.mxu0 0.0
    %89 = vmatprep.subr.mxu0 0.0
    %90 = vmatpush1.msra.mxu0 0.0
    %91 = vmatprep.subr.mxu0 0.0
    %92 = vmatpush1.msra.mxu0 0.0
    %93 = vmatprep.subr.mxu0 0.0
    %94 = vmatpush1.msra.mxu0 0.0
    %95 = vmatprep.subr.mxu0 0.0
    %96 = vmatpush1.msra.mxu0 0.0
    %97 = vmatprep.subr.mxu0 0.0
    %98 = vmatpush1.msra.mxu0 0.0
    %99 = vmatprep.subr.mxu0 0.0
    %100 = vmatpush1.msra.mxu0 0.0
    %101 = vmatprep.subr.mxu0 0.0
    %102 = vmatpush1.msra.mxu0 0.0
    %103 = vmatprep.subr.mxu0 0.0
    %104 = vmatpush1.msra.mxu0 0.0
    %105 = vmatprep.subr.mxu0 0.0
    %106 = vmatpush1.msra.mxu0 0.0
    %107 = vmatprep.subr.mxu0 0.0
    %108 = vmatpush1.msra.mxu0 0.0
    %109 = vmatprep.subr.mxu0 0.0
    %110 = vmatpush1.msra.mxu0 0.0
    %111 = vmatprep.mubr.f32.mxu0 0.0
    %v112 = vand.u32 %v43, 4294901760
    %v113 = vsub.f32 %v43, %v112
    %v114 = vand.u32 %v113, 4294901760
    %v115 = vsub.f32 %v113, %v114
    %v116 = vand.u32 %v115, 4294901760
    %117 = vmatmul.mubr.f32.gmra.mrb[0].mxu0 %v116
    %v118 = vpop.f32.mrb[0].mxu0
    %v119 = vadd.f32 0.0, %v118
    %v120 = vpop.f32.mrb[0].mxu0
    %121 = vdwg.mxu0
    %122 = vmatprep.subr.mxu0 0.0
    %v123 = vand.u32 %v39, 4294901760
    %v124 = vsub.f32 %v39, %v123
    %v125 = vand.u32 %v124, 4294901760
    %v126 = vsub.f32 %v124, %v125
    %v127 = vand.u32 %v126, 4294901760
    %128 = vmatpush1.msra.mxu0 %v127
    %129 = vmatprep.subr.mxu0 0.0
    %v130 = vand.u32 %v40, 4294901760
    %v131 = vsub.f32 %v40, %v130
    %v132 = vand.u32 %v131, 4294901760
    %v133 = vsub.f32 %v131, %v132
    %v134 = vand.u32 %v133, 4294901760
    %135 = vmatpush1.msra.mxu0 %v134
    %136 = vmatprep.subr.mxu0 0.0
    %137 = vmatpush1.msra.mxu0 0.0
    %138 = vmatprep.subr.mxu0 0.0
    %139 = vmatpush1.msra.mxu0 0.0
    %140 = vmatprep.subr.mxu0 0.0
    %141 = vmatpush1.msra.mxu0 0.0
    %142 = vmatprep.subr.mxu0 0.0
    %143 = vmatpush1.msra.mxu0 0.0
    %144 = vmatprep.subr.mxu0 0.0
    %145 = vmatpush1.msra.mxu0 0.0
    %146 = vmatprep.subr.mxu0 0.0
    %147 = vmatpush1.msra.mxu0 0.0
    %148 = vmatprep.subr.mxu0 0.0
    %149 = vmatpush1.msra.mxu0 0.0
    %150 = vmatprep.subr.mxu0 0.0
    %151 = vmatpush1.msra.mxu0 0.0
    %152 = vmatprep.subr.mxu0 0.0
    %153 = vmatpush1.msra.mxu0 0.0
    %154 = vmatprep.subr.mxu0 0.0
    %155 = vmatpush1.msra.mxu0 0.0
    %156 = vmatprep.subr.mxu0 0.0
    %157 = vmatpush1.msra.mxu0 0.0
    %158 = vmatprep.subr.mxu0 0.0
    %159 = vmatpush1.msra.mxu0 0.0
    %160 = vmatprep.subr.mxu0 0.0
    %161 = vmatpush1.msra.mxu0 0.0
    %162 = vmatprep.subr.mxu0 0.0
    %163 = vmatpush1.msra.mxu0 0.0
    %164 = vmatprep.subr.mxu0 0.0
    %165 = vmatpush1.msra.mxu0 0.0
    %166 = vmatprep.subr.mxu0 0.0
    %167 = vmatpush1.msra.mxu0 0.0
    %168 = vmatprep.subr.mxu0 0.0
    %169 = vmatpush1.msra.mxu0 0.0
    %170 = vmatprep.subr.mxu0 0.0
    %171 = vmatpush1.msra.mxu0 0.0
    %172 = vmatprep.subr.mxu0 0.0
    %173 = vmatpush1.msra.mxu0 0.0
    %174 = vmatprep.subr.mxu0 0.0
    %175 = vmatpush1.msra.mxu0 0.0
    %176 = vmatprep.subr.mxu0 0.0
    %177 = vmatpush1.msra.mxu0 0.0
    %178 = vmatprep.subr.mxu0 0.0
    %179 = vmatpush1.msra.mxu0 0.0
    %180 = vmatprep.subr.mxu0 0.0
    %181 = vmatpush1.msra.mxu0 0.0
    %182 = vmatprep.subr.mxu0 0.0
    %183 = vmatpush1.msra.mxu0 0.0
    %184 = vmatprep.subr.mxu0 0.0
    %185 = vmatpush1.msra.mxu0 0.0
    %186 = vmatprep.subr.mxu0 0.0
    %187 = vmatpush1.msra.mxu0 0.0
    %188 = vmatprep.subr.mxu0 0.0
    %189 = vmatpush1.msra.mxu0 0.0
    %190 = vmatprep.subr.mxu0 0.0
    %191 = vmatpush1.msra.mxu0 0.0
    %192 = vmatprep.subr.mxu0 0.0
    %193 = vmatpush1.msra.mxu0 0.0
    %194 = vmatprep.subr.mxu0 0.0
    %195 = vmatpush1.msra.mxu0 0.0
    %196 = vmatprep.mubr.f32.mxu0 0.0
    %v197 = vand.u32 %v43, 4294901760
    %198 = vmatmul.mubr.f32.gmra.mrb[0].mxu0 %v197
    %v199 = vpop.f32.mrb[0].mxu0
    %v200 = vadd.f32 %v119, %v199
    %v201 = vpop.f32.mrb[0].mxu0
    %202 = vdwg.mxu0
    %203 = vmatprep.subr.mxu0 0.0
    %v204 = vand.u32 %v39, 4294901760
    %v205 = vsub.f32 %v39, %v204
    %206 = vmatpush1.msra.mxu0 %v205
    %207 = vmatprep.subr.mxu0 0.0
    %v208 = vand.u32 %v40, 4294901760
    %v209 = vsub.f32 %v40, %v208
    %210 = vmatpush1.msra.mxu0 %v209
    %211 = vmatprep.subr.mxu0 0.0
    %212 = vmatpush1.msra.mxu0 0.0
    %213 = vmatprep.subr.mxu0 0.0
    %214 = vmatpush1.msra.mxu0 0.0
    %215 = vmatprep.subr.mxu0 0.0
    %216 = vmatpush1.msra.mxu0 0.0
    %217 = vmatprep.subr.mxu0 0.0
    %218 = vmatpush1.msra.mxu0 0.0
    %219 = vmatprep.subr.mxu0 0.0
    %220 = vmatpush1.msra.mxu0 0.0
    %221 = vmatprep.subr.mxu0 0.0
    %222 = vmatpush1.msra.mxu0 0.0
    %223 = vmatprep.subr.mxu0 0.0
    %224 = vmatpush1.msra.mxu0 0.0
    %225 = vmatprep.subr.mxu0 0.0
    %226 = vmatpush1.msra.mxu0 0.0
    %227 = vmatprep.subr.mxu0 0.0
    %228 = vmatpush1.msra.mxu0 0.0
    %229 = vmatprep.subr.mxu0 0.0
    %230 = vmatpush1.msra.mxu0 0.0
    %231 = vmatprep.subr.mxu0 0.0
    %232 = vmatpush1.msra.mxu0 0.0
    %233 = vmatprep.subr.mxu0 0.0
    %234 = vmatpush1.msra.mxu0 0.0
    %235 = vmatprep.subr.mxu0 0.0
    %236 = vmatpush1.msra.mxu0 0.0
    %237 = vmatprep.subr.mxu0 0.0
    %238 = vmatpush1.msra.mxu0 0.0
    %239 = vmatprep.subr.mxu0 0.0
    %240 = vmatpush1.msra.mxu0 0.0
    %241 = vmatprep.subr.mxu0 0.0
    %242 = vmatpush1.msra.mxu0 0.0
    %243 = vmatprep.subr.mxu0 0.0
    %244 = vmatpush1.msra.mxu0 0.0
    %245 = vmatprep.subr.mxu0 0.0
    %246 = vmatpush1.msra.mxu0 0.0
    %247 = vmatprep.subr.mxu0 0.0
    %248 = vmatpush1.msra.mxu0 0.0
    %249 = vmatprep.subr.mxu0 0.0
    %250 = vmatpush1.msra.mxu0 0.0
    %251 = vmatprep.subr.mxu0 0.0
    %252 = vmatpush1.msra.mxu0 0.0
    %253 = vmatprep.subr.mxu0 0.0
    %254 = vmatpush1.msra.mxu0 0.0
    %255 = vmatprep.subr.mxu0 0.0
    %256 = vmatpush1.msra.mxu0 0.0
    %257 = vmatprep.subr.mxu0 0.0
    %258 = vmatpush1.msra.mxu0 0.0
    %259 = vmatprep.subr.mxu0 0.0
    %260 = vmatpush1.msra.mxu0 0.0
    %261 = vmatprep.subr.mxu0 0.0
    %262 = vmatpush1.msra.mxu0 0.0
    %263 = vmatprep.subr.mxu0 0.0
    %264 = vmatpush1.msra.mxu0 0.0
    %265 = vmatprep.subr.mxu0 0.0
    %266 = vmatpush1.msra.mxu0 0.0
    %267 = vmatprep.subr.mxu0 0.0
    %268 = vmatpush1.msra.mxu0 0.0
    %269 = vmatprep.subr.mxu0 0.0
    %270 = vmatpush1.msra.mxu0 0.0
    %271 = vmatprep.mubr.f32.mxu0 0.0
    %v272 = vand.u32 %v43, 4294901760
    %v273 = vsub.f32 %v43, %v272
    %274 = vmatmul.mubr.f32.gmra.mrb[0].mxu0 %v273
    %v275 = vpop.f32.mrb[0].mxu0
    %v276 = vadd.f32 %v200, %v275
    %v277 = vpop.f32.mrb[0].mxu0
    %278 = vdwg.mxu0
    %279 = vmatprep.subr.mxu0 0.0
    %v280 = vand.u32 %v39, 4294901760
    %281 = vmatpush1.msra.mxu0 %v280
    %282 = vmatprep.subr.mxu0 0.0
    %v283 = vand.u32 %v40, 4294901760
    %284 = vmatpush1.msra.mxu0 %v283
    %285 = vmatprep.subr.mxu0 0.0
    %286 = vmatpush1.msra.mxu0 0.0
    %287 = vmatprep.subr.mxu0 0.0
    %288 = vmatpush1.msra.mxu0 0.0
    %289 = vmatprep.subr.mxu0 0.0
    %290 = vmatpush1.msra.mxu0 0.0
    %291 = vmatprep.subr.mxu0 0.0
    %292 = vmatpush1.msra.mxu0 0.0
    %293 = vmatprep.subr.mxu0 0.0
    %294 = vmatpush1.msra.mxu0 0.0
    %295 = vmatprep.subr.mxu0 0.0
    %296 = vmatpush1.msra.mxu0 0.0
    %297 = vmatprep.subr.mxu0 0.0
    %298 = vmatpush1.msra.mxu0 0.0
    %299 = vmatprep.subr.mxu0 0.0
    %300 = vmatpush1.msra.mxu0 0.0
    %301 = vmatprep.subr.mxu0 0.0
    %302 = vmatpush1.msra.mxu0 0.0
    %303 = vmatprep.subr.mxu0 0.0
    %304 = vmatpush1.msra.mxu0 0.0
    %305 = vmatprep.subr.mxu0 0.0
    %306 = vmatpush1.msra.mxu0 0.0
    %307 = vmatprep.subr.mxu0 0.0
    %308 = vmatpush1.msra.mxu0 0.0
    %309 = vmatprep.subr.mxu0 0.0
    %310 = vmatpush1.msra.mxu0 0.0
    %311 = vmatprep.subr.mxu0 0.0
    %312 = vmatpush1.msra.mxu0 0.0
    %313 = vmatprep.subr.mxu0 0.0
    %314 = vmatpush1.msra.mxu0 0.0
    %315 = vmatprep.subr.mxu0 0.0
    %316 = vmatpush1.msra.mxu0 0.0
    %317 = vmatprep.subr.mxu0 0.0
    %318 = vmatpush1.msra.mxu0 0.0
    %319 = vmatprep.subr.mxu0 0.0
    %320 = vmatpush1.msra.mxu0 0.0
    %321 = vmatprep.subr.mxu0 0.0
    %322 = vmatpush1.msra.mxu0 0.0
    %323 = vmatprep.subr.mxu0 0.0
    %324 = vmatpush1.msra.mxu0 0.0
    %325 = vmatprep.subr.mxu0 0.0
    %326 = vmatpush1.msra.mxu0 0.0
    %327 = vmatprep.subr.mxu0 0.0
    %328 = vmatpush1.msra.mxu0 0.0
    %329 = vmatprep.subr.mxu0 0.0
    %330 = vmatpush1.msra.mxu0 0.0
    %331 = vmatprep.subr.mxu0 0.0
    %332 = vmatpush1.msra.mxu0 0.0
    %333 = vmatprep.subr.mxu0 0.0
    %334 = vmatpush1.msra.mxu0 0.0
    %335 = vmatprep.subr.mxu0 0.0
    %336 = vmatpush1.msra.mxu0 0.0
    %337 = vmatprep.subr.mxu0 0.0
    %338 = vmatpush1.msra.mxu0 0.0
    %339 = vmatprep.subr.mxu0 0.0
    %340 = vmatpush1.msra.mxu0 0.0
    %341 = vmatprep.subr.mxu0 0.0
    %342 = vmatpush1.msra.mxu0 0.0
    %343 = vmatprep.subr.mxu0 0.0
    %344 = vmatpush1.msra.mxu0 0.0
    %345 = vmatprep.mubr.f32.mxu0 0.0
    %v346 = vand.u32 %v43, 4294901760
    %v347 = vsub.f32 %v43, %v346
    %v348 = vand.u32 %v347, 4294901760
    %349 = vmatmul.mubr.f32.gmra.mrb[0].mxu0 %v348
    %v350 = vpop.f32.mrb[0].mxu0
    %v351 = vadd.f32 %v276, %v350
    %v352 = vpop.f32.mrb[0].mxu0
    %353 = vdwg.mxu0
    %354 = vmatprep.subr.mxu0 0.0
    %v355 = vand.u32 %v39, 4294901760
    %v356 = vsub.f32 %v39, %v355
    %v357 = vand.u32 %v356, 4294901760
    %358 = vmatpush1.msra.mxu0 %v357
    %359 = vmatprep.subr.mxu0 0.0
    %v360 = vand.u32 %v40, 4294901760
    %v361 = vsub.f32 %v40, %v360
    %v362 = vand.u32 %v361, 4294901760
    %363 = vmatpush1.msra.mxu0 %v362
    %364 = vmatprep.subr.mxu0 0.0
    %365 = vmatpush1.msra.mxu0 0.0
    %366 = vmatprep.subr.mxu0 0.0
    %367 = vmatpush1.msra.mxu0 0.0
    %368 = vmatprep.subr.mxu0 0.0
    %369 = vmatpush1.msra.mxu0 0.0
    %370 = vmatprep.subr.mxu0 0.0
    %371 = vmatpush1.msra.mxu0 0.0
    %372 = vmatprep.subr.mxu0 0.0
    %373 = vmatpush1.msra.mxu0 0.0
    %374 = vmatprep.subr.mxu0 0.0
    %375 = vmatpush1.msra.mxu0 0.0
    %376 = vmatprep.subr.mxu0 0.0
    %377 = vmatpush1.msra.mxu0 0.0
    %378 = vmatprep.subr.mxu0 0.0
    %379 = vmatpush1.msra.mxu0 0.0
    %380 = vmatprep.subr.mxu0 0.0
    %381 = vmatpush1.msra.mxu0 0.0
    %382 = vmatprep.subr.mxu0 0.0
    %383 = vmatpush1.msra.mxu0 0.0
    %384 = vmatprep.subr.mxu0 0.0
    %385 = vmatpush1.msra.mxu0 0.0
    %386 = vmatprep.subr.mxu0 0.0
    %387 = vmatpush1.msra.mxu0 0.0
    %388 = vmatprep.subr.mxu0 0.0
    %389 = vmatpush1.msra.mxu0 0.0
    %390 = vmatprep.subr.mxu0 0.0
    %391 = vmatpush1.msra.mxu0 0.0
    %392 = vmatprep.subr.mxu0 0.0
    %393 = vmatpush1.msra.mxu0 0.0
    %394 = vmatprep.subr.mxu0 0.0
    %395 = vmatpush1.msra.mxu0 0.0
    %396 = vmatprep.subr.mxu0 0.0
    %397 = vmatpush1.msra.mxu0 0.0
    %398 = vmatprep.subr.mxu0 0.0
    %399 = vmatpush1.msra.mxu0 0.0
    %400 = vmatprep.subr.mxu0 0.0
    %401 = vmatpush1.msra.mxu0 0.0
    %402 = vmatprep.subr.mxu0 0.0
    %403 = vmatpush1.msra.mxu0 0.0
    %404 = vmatprep.subr.mxu0 0.0
    %405 = vmatpush1.msra.mxu0 0.0
    %406 = vmatprep.subr.mxu0 0.0
    %407 = vmatpush1.msra.mxu0 0.0
    %408 = vmatprep.subr.mxu0 0.0
    %409 = vmatpush1.msra.mxu0 0.0
    %410 = vmatprep.subr.mxu0 0.0
    %411 = vmatpush1.msra.mxu0 0.0
    %412 = vmatprep.subr.mxu0 0.0
    %413 = vmatpush1.msra.mxu0 0.0
    %414 = vmatprep.subr.mxu0 0.0
    %415 = vmatpush1.msra.mxu0 0.0
    %416 = vmatprep.subr.mxu0 0.0
    %417 = vmatpush1.msra.mxu0 0.0
    %418 = vmatprep.subr.mxu0 0.0
    %419 = vmatpush1.msra.mxu0 0.0
    %420 = vmatprep.subr.mxu0 0.0
    %421 = vmatpush1.msra.mxu0 0.0
    %422 = vmatprep.subr.mxu0 0.0
    %423 = vmatpush1.msra.mxu0 0.0
    %424 = vmatprep.mubr.f32.mxu0 0.0
    %v425 = vand.u32 %v43, 4294901760
    %426 = vmatmul.mubr.f32.gmra.mrb[0].mxu0 %v425
    %v427 = vpop.f32.mrb[0].mxu0
    %v428 = vadd.f32 %v351, %v427
    %v429 = vpop.f32.mrb[0].mxu0
    %430 = vdwg.mxu0
    %431 = vmatprep.subr.mxu0 0.0
    %v432 = vand.u32 %v39, 4294901760
    %433 = vmatpush1.msra.mxu0 %v432
    %434 = vmatprep.subr.mxu0 0.0
    %v435 = vand.u32 %v40, 4294901760
    %436 = vmatpush1.msra.mxu0 %v435
    %437 = vmatprep.subr.mxu0 0.0
    %438 = vmatpush1.msra.mxu0 0.0
    %439 = vmatprep.subr.mxu0 0.0
    %440 = vmatpush1.msra.mxu0 0.0
    %441 = vmatprep.subr.mxu0 0.0
    %442 = vmatpush1.msra.mxu0 0.0
    %443 = vmatprep.subr.mxu0 0.0
    %444 = vmatpush1.msra.mxu0 0.0
    %445 = vmatprep.subr.mxu0 0.0
    %446 = vmatpush1.msra.mxu0 0.0
    %447 = vmatprep.subr.mxu0 0.0
    %448 = vmatpush1.msra.mxu0 0.0
    %449 = vmatprep.subr.mxu0 0.0
    %450 = vmatpush1.msra.mxu0 0.0
    %451 = vmatprep.subr.mxu0 0.0
    %452 = vmatpush1.msra.mxu0 0.0
    %453 = vmatprep.subr.mxu0 0.0
    %454 = vmatpush1.msra.mxu0 0.0
    %455 = vmatprep.subr.mxu0 0.0
    %456 = vmatpush1.msra.mxu0 0.0
    %457 = vmatprep.subr.mxu0 0.0
    %458 = vmatpush1.msra.mxu0 0.0
    %459 = vmatprep.subr.mxu0 0.0
    %460 = vmatpush1.msra.mxu0 0.0
    %461 = vmatprep.subr.mxu0 0.0
    %462 = vmatpush1.msra.mxu0 0.0
    %463 = vmatprep.subr.mxu0 0.0
    %464 = vmatpush1.msra.mxu0 0.0
    %465 = vmatprep.subr.mxu0 0.0
    %466 = vmatpush1.msra.mxu0 0.0
    %467 = vmatprep.subr.mxu0 0.0
    %468 = vmatpush1.msra.mxu0 0.0
    %469 = vmatprep.subr.mxu0 0.0
    %470 = vmatpush1.msra.mxu0 0.0
    %471 = vmatprep.subr.mxu0 0.0
    %472 = vmatpush1.msra.mxu0 0.0
    %473 = vmatprep.subr.mxu0 0.0
    %474 = vmatpush1.msra.mxu0 0.0
    %475 = vmatprep.subr.mxu0 0.0
    %476 = vmatpush1.msra.mxu0 0.0
    %477 = vmatprep.subr.mxu0 0.0
    %478 = vmatpush1.msra.mxu0 0.0
    %479 = vmatprep.subr.mxu0 0.0
    %480 = vmatpush1.msra.mxu0 0.0
    %481 = vmatprep.subr.mxu0 0.0
    %482 = vmatpush1.msra.mxu0 0.0
    %483 = vmatprep.subr.mxu0 0.0
    %484 = vmatpush1.msra.mxu0 0.0
    %485 = vmatprep.subr.mxu0 0.0
    %486 = vmatpush1.msra.mxu0 0.0
    %487 = vmatprep.subr.mxu0 0.0
    %488 = vmatpush1.msra.mxu0 0.0
    %489 = vmatprep.subr.mxu0 0.0
    %490 = vmatpush1.msra.mxu0 0.0
    %491 = vmatprep.subr.mxu0 0.0
    %492 = vmatpush1.msra.mxu0 0.0
    %493 = vmatprep.subr.mxu0 0.0
    %494 = vmatpush1.msra.mxu0 0.0
    %495 = vmatprep.subr.mxu0 0.0
    %496 = vmatpush1.msra.mxu0 0.0
    %497 = vmatprep.mubr.f32.mxu0 0.0
    %v498 = vand.u32 %v43, 4294901760
    %499 = vmatmul.mubr.f32.gmra.mrb[0].mxu0 %v498
    %v500 = vpop.f32.mrb[0].mxu0
    %v501 = vadd.f32 %v428, %v500
    %v502 = vpop.f32.mrb[0].mxu0
    %503 = vdwg.mxu0
    %v504 = vand.u32 2147483647, %v501
    %vm505 = vcmp.le.f32.partialorder %v504, 0.7853982
    %vm506 = vcmp.lt.s32.totalorder %v501, 0
    %v507 = vand.u32 %v501, 2139095040
    %v508 = vshrl.u32 %v507, 23
    %v509 = vsub.s32 %v508, 127
    %v510 = vand.u32 2147483647, %v501
    %v511 = vand.u32 %v510, 8388607
    %v512 = vor.u32 %v511, 8388608
    %v513 = vsub.s32 0, %v512
    %v514 = vadd.s32 %v509, 1
    %vm515 = vcmp.gt.s32.totalorder %v514, 0
    %v516 = vsel %vm515, %v514, 0
    %v517 = vshrl.u32 %v516, 5
    %v518 = vand.u32 %v516, 31
    %v519 = vsub.s32 32, %v518
    %v520 = vshrl.u32 683565275, %v519
    %v521 = vshll.u32 683565275, %v518
    %v522 = vshrl.u32 2475754826, %v519
    %v523 = vor.u32 %v521, %v522
    %v524 = vshll.u32 2475754826, %v518
    %v525 = vshrl.u32 2131351028, %v519
    %v526 = vor.u32 %v524, %v525
    %v527 = vshll.u32 2131351028, %v518
    %v528 = vshrl.u32 2102212464, %v519
    %v529 = vor.u32 %v527, %v528
    %v530 = vshll.u32 2102212464, %v518
    %v531 = vshrl.u32 920167782, %v519
    %v532 = vor.u32 %v530, %v531
    %v533 = vshll.u32 920167782, %v518
    %v534 = vshrl.u32 1326507024, %v519
    %v535 = vor.u32 %v533, %v534
    %vm536 = vcmp.lt.s32.totalorder %v517, 1
    %vm537 = vcmp.lt.s32.totalorder %v517, 2
    %vm538 = vcmp.lt.s32.totalorder %v517, 3
    %vm539 = vcmp.lt.s32.totalorder %v517, 4
    %v540 = vsel %vm536, %v520, %v523
    %v541 = vsel %vm539, %v529, 2102212464
    %v542 = vsel %vm538, %v526, %v541
    %v543 = vsel %vm537, %v540, %v542
    %v544 = vsel %vm536, %v523, %v526
    %v545 = vsel %vm539, %v532, 920167782
    %v546 = vsel %vm538, %v529, %v545
    %v547 = vsel %vm537, %v544, %v546
    %v548 = vsel %vm536, %v526, %v529
    %v549 = vsel %vm539, %v535, 1326507024
    %v550 = vsel %vm538, %v532, %v549
    %v551 = vsel %vm537, %v548, %v550
    %v552 = vshll.u32 %v512, 8
    %v553 = vmul.u32.u64.compose %v552, %v551
    %v554 = vextract.low.u32 %v553
    %v555 = vextract.high.u32 %v553
    %v556 = vmul.u32.u64.compose %v552, %v547
    %v557 = vextract.low.u32 %v556
    %v558 = vextract.high.u32 %v556
    %v559 = vmul.u32 %v552, %v543
    %v560 = vadd.s32 %v555, %v557
    %vm561 = vc.u32 %v555, %v557
    %v562 = vadd.s32 %v558, 1
    %v563 = vsel %vm561, %v562, %v558
    %v564 = vadd.s32 %v559, %v563
    %v565 = vadd.s32 %v564, 536870912
    %v566 = vshrl.u32 %v565, 30
    %v567 = vshll.u32 %v566, 30
    %v568 = vsub.s32 %v564, %v567
    %vm569 = vcmp.lt.s32.totalorder %v568, 0
    %v570 = vsub.s32 0, %v568
    %v571 = vsel %vm569, %v570, %v568
    %v572 = vclz %v571
    %v573 = vsub.s32 %v572, 2
    %vm574 = vcmp.gt.s32.totalorder 0, %v573
    %v575 = vsel %vm574, 0, %v573
    %v576 = vsub.s32 32, %v575
    %v577 = vshll.u32 %v568, %v575
    %v578 = vshrl.u32 %v560, %v576
    %v579 = vor.u32 %v577, %v578
    %v580 = vsub.s32 4294967266, %v575
    %v581 = vadd.s32 %v580, 127
    %v582 = vshll.u32 %v581, 23
    %v583 = vor.u32 4788187, %v582
    %v584 = vand.u32 2147483647, %v583
    %v586 = vcvt.s32.f32 %v579
    %v587 = vmul.f32 %v586, %v584
    %v588 = vxor.u32 %v587, 2147483648
    %v589 = vsel %vm506, %v588, %v587
    %v590 = vsub.s32 4, %v566
    %v591 = vsel %vm506, %v590, %v566
    %v592 = vsel %vm505, %v501, %v589
    %v593 = vsel %vm505, 0, %v591
    %v594 = vcosq.f32.pop %v592
    %v595 = vsinq.f32.pop %v592
    %vm596 = vweird.f32 %v501
    %v597 = vadd.s32 %v593, 3
    %v598 = vand.u32 %v597, 3
    %vm599 = vcmp.lt.s32.totalorder %v598, 2
    %vm600 = vcmp.eq.s32.totalorder %v598, 0
    %v601 = vxor.u32 %v595, 2147483648
    %v602 = vsel %vm600, %v594, %v601
    %vm603 = vcmp.eq.s32.totalorder %v598, 2
    %v604 = vxor.u32 %v594, 2147483648
    %v605 = vsel %vm603, %v604, %v595
    %v606 = vsel %vm599, %v602, %v605
    %v607 = vsel %vm596, nan, %v606
    %608 = vst [vmem:[#allocation7] sm:$0xff] %v607
    // Predicated region
    $region18: #{tpu_custom_call.1} parent=1 // pred_check
      _
    $region19: #{tpu_custom_call.1} parent=1 // pred_check_branch
      %610 = sbr.rel (0) target = $region21
    $region20: #{tpu_custom_call.1} parent=1 // pred_region
      %s612 = ssub.s32 128, 128
      %613 = vsyncadd [#allocation4], %s612
      %s615 = sshll.u32 [#allocation7], 4
      %s616 = int_to_ptr.vmem [resolvable:$true] %s615
      %618 = dma.vmem_to_hbm [thread:$0]  %s616, 128, %s2, [#allocation4]
    $region21: #{tpu_custom_call.1} parent=1 // pred_fallthru
      _
    // Predicated region
    $region22: #{tpu_custom_call.1} parent=1 // pred_check
      _
    $region23: #{tpu_custom_call.1} parent=1 // pred_check_branch
      %620 = sbr.rel (0) target = $region25
    $region24: #{tpu_custom_call.1} parent=1 // pred_region
      %621 = dma.done [#allocation4], 128
    $region25: #{tpu_custom_call.1} parent=1 // pred_fallthru
      _
    %622 = vsyncpa [#allocation3], 1
    %623 = vsyncpa [#allocation6], 1
    %624 = vsyncpa [#allocation4], 1

</llo_original>
